<compile_context>
chip_gen: v7x
topology: tpu7x:2x2x1
jax: 0.10.0
libtpu: 0.0.40
codegen_flags: <defaults>
</compile_context>

<pallas_src>
import functools

import jax
import jax.numpy as jnp
from jax import lax
from jax.experimental import pallas as pl
from jax.experimental.pallas import tpu as pltpu


def _write_per_image_loss(out_ref, channel_sums, inv_hw):
    """channel_sums: (B_TILE, 3) f32 spatial sums -> Zero-DCE color loss per image."""
    means = channel_sums * jnp.float32(inv_hw)        # scale once, in the epilogue
    mr = means[:, 0:1]
    mg = means[:, 1:2]
    mb = means[:, 2:3]
    drg = (mr - mg) ** 2
    drb = (mr - mb) ** 2
    dgb = (mb - mg) ** 2
    k = jnp.sqrt(drg * drg + drb * drb + dgb * dgb)   # (B_TILE, 1)
    # Lane-dense, unmasked store: broadcast the per-image scalar across 128 lanes.
    out_ref[...] = jnp.broadcast_to(k[:, :, None], out_ref.shape)


def _cc_dense_kernel(x_ref, out_ref, sum_ref, *, inv_hw, rows_total, need_mask):
    """Dense path.  Grid = (batch_steps, row_tiles).

    x_ref   : (B_TILE, 3, R_TILE, 128)  current spatial row-tile(s)
    out_ref : (B_TILE, 1, 128)          per-image result (resident across axis 1)
    sum_ref : (B_TILE, 3, 128) VMEM     lane-resident per-channel running sums
    """
    t = pl.program_id(1)
    nt = pl.num_programs(1)

    @pl.when(t == 0)
    def _init():
        sum_ref[...] = jnp.zeros_like(sum_ref)

    x = x_ref[...].astype(jnp.float32)                 # cast after load (bf16 friendly)
    if need_mask:
        # Ragged last row-tile: out-of-bounds rows hold unspecified data -> mask.
        r_tile = x.shape[2]
        row = t * r_tile + lax.broadcasted_iota(jnp.int32, x.shape, 2)
        x = jnp.where(row < rows_total, x, 0.0)
    # Hot loop: collapse the rows axis (vreg adds + one sublane fold); the
    # cross-lane reduce is deferred to the epilogue so DMA stays the only
    # binding resource.
    sum_ref[...] += jnp.sum(x, axis=2)                 # (B_TILE, 3, 128)

    @pl.when(t == nt - 1)
    def _finalize():
        channel_sums = jnp.sum(sum_ref[...], axis=-1)  # single lane reduce per image
        _write_per_image_loss(out_ref, channel_sums, inv_hw)


def _cc_flat_kernel(x_ref, out_ref, sum_ref, *, inv_hw, hw_total, need_mask):
    """Fallback path for H*W not a multiple of 128 (flat (b, 3, hw) layout).

    x_ref   : (B_TILE, 3, TILE)
    out_ref : (B_TILE, 1, 128)
    sum_ref : (B_TILE, 3, 1) VMEM
    """
    t = pl.program_id(1)
    nt = pl.num_programs(1)

    @pl.when(t == 0)
    def _init():
        sum_ref[...] = jnp.zeros_like(sum_ref)

    x = x_ref[...].astype(jnp.float32)
    if need_mask:
        tile = x.shape[2]
        col = t * tile + lax.broadcasted_iota(jnp.int32, x.shape, 2)
        x = jnp.where(col < hw_total, x, 0.0)
    sum_ref[...] += jnp.sum(x, axis=2, keepdims=True)  # (B_TILE, 3, 1)

    @pl.when(t == nt - 1)
    def _finalize():
        channel_sums = jnp.sum(sum_ref[...], axis=-1)  # (B_TILE, 3)
        _write_per_image_loss(out_ref, channel_sums, inv_hw)


def _pick_batch_tile(b, limit):
    """Largest divisor of b that is <= limit while keeping >= 2 grid steps along
    the parallel batch axis (v7x has 2 TensorCores per chip)."""
    cap = min(limit, b // 2) if b >= 2 else 1
    cap = max(cap, 1)
    for bt in range(cap, 0, -1):
        if b % bt == 0:
            return bt
    return 1


def color_constancy_loss(x, *, tile_rows=2048, flat_tile=128 * 1024, batch_pack=8):
    """sqrt(Drg^2 + Drb^2 + Dgb^2) averaged over the batch (Zero-DCE color loss).

    tile_rows : rows (of 128 lanes) per grid step on the dense path.  2048 rows
                = 256K elems/channel = 3 MB f32 block (6 MB double-buffered);
                safe on every chip.  Bump to 4096-8192 on v6e/v7x (and set
                vmem_limit_bytes) for large images.
    flat_tile : elements per grid step on the hw % 128 != 0 fallback path.
    batch_pack: max images packed per grid step on the single-tile path.
    """
    b, c, h, w = x.shape
    assert c == 3, "Color constancy loss expects 3 (RGB) channels"
    hw = h * w
    inv_hw = 1.0 / float(hw)
    itemsize = jnp.dtype(x.dtype).itemsize
    block_budget_bytes = tile_rows * 3 * 128 * 4       # per-step VMEM budget

    if hw % 128 == 0:
        # Dense (sublane, lane)-packed layout: no 3->8 sublane padding.
        rows = hw // 128
        x_in = x.reshape(b, c, rows, 128)              # free reshape (contiguous)
        if rows <= tile_rows:
            # Single spatial tile per image: pack several images per grid step.
            per_image_bytes = c * rows * 128 * itemsize
            limit = max(1, min(batch_pack, block_budget_bytes // max(per_image_bytes, 1)))
            b_tile = _pick_batch_tile(b, limit)
            r_tile, n_tiles, need_mask = rows, 1, False
        else:
            assert tile_rows % 8 == 0, "tile_rows must be a multiple of 8"
            b_tile = 1
            r_tile = tile_rows
            n_tiles = pl.cdiv(rows, r_tile)
            need_mask = (rows % r_tile) != 0           # mask in-kernel, no jnp.pad
        kernel = functools.partial(_cc_dense_kernel, inv_hw=inv_hw,
                                   rows_total=rows, need_mask=need_mask)
        in_spec = pl.BlockSpec((b_tile, c, r_tile, 128), lambda i, t: (i, 0, t, 0))
        scratch = pltpu.VMEM((b_tile, c, 128), jnp.float32)
    else:
        # Fallback for odd spatial sizes: flat (b, 3, hw) layout.
        x_in = x.reshape(b, c, hw)
        if hw <= flat_tile:
            per_image_bytes = c * hw * itemsize
            limit = max(1, min(batch_pack, block_budget_bytes // max(per_image_bytes, 1)))
            b_tile = _pick_batch_tile(b, limit)
            s_tile, n_tiles, need_mask = hw, 1, False  # full-extent block, no mask
        else:
            assert flat_tile % 128 == 0, "flat_tile must be a multiple of 128"
            b_tile = 1
            s_tile = flat_tile
            n_tiles = pl.cdiv(hw, s_tile)
            need_mask = (hw % s_tile) != 0             # mask in-kernel, no jnp.pad
        kernel = functools.partial(_cc_flat_kernel, inv_hw=inv_hw,
                                   hw_total=hw, need_mask=need_mask)
        in_spec = pl.BlockSpec((b_tile, c, s_tile), lambda i, t: (i, 0, t))
        scratch = pltpu.VMEM((b_tile, c, 1), jnp.float32)

    out = pl.pallas_call(
        kernel,
        out_shape=jax.ShapeDtypeStruct((b, 1, 128), jnp.float32),
        grid_spec=pltpu.PrefetchScalarGridSpec(
            num_scalar_prefetch=0,
            grid=(b // b_tile, n_tiles),               # reduction axis last
            in_specs=[in_spec],
            out_specs=pl.BlockSpec((b_tile, 1, 128), lambda i, t: (i, 0, 0)),
            scratch_shapes=[scratch],
        ),
        compiler_params=pltpu.CompilerParams(
            dimension_semantics=("parallel", "arbitrary"),
        ),
        cost_estimate=pl.CostEstimate(
            flops=b * c * hw,
            transcendentals=b,
            bytes_accessed=b * c * hw * itemsize + b * 128 * 4,
        ),
    )(x_in)

    per_image = out[:, 0, 0]                           # (b,)
    return jnp.mean(per_image)                         # batch mean in the wrapper


def color_constancy_loss_ref(x):
    # Pure-JAX reference mirroring the PyTorch forward.
    xf = x.astype(jnp.float32)
    mean_rgb = jnp.mean(xf, axis=(2, 3), keepdims=True)       # (b, 3, 1, 1)
    mr, mg, mb = mean_rgb[:, 0:1], mean_rgb[:, 1:2], mean_rgb[:, 2:3]
    drg = (mr - mg) ** 2
    drb = (mr - mb) ** 2
    dgb = (mb - mg) ** 2
    return jnp.mean(jnp.sqrt(drg ** 2 + drb ** 2 + dgb ** 2))


if __name__ == "__main__":
    key = jax.random.PRNGKey(0)
    k1, k2, k3, k4 = jax.random.split(key, 4)

    # (a) Typical small dense case: hw % 128 == 0, single tile, b=2 (2 parallel steps).
    xa = jax.random.uniform(k1, (2, 3, 16, 16), dtype=jnp.float32)
    outa = jax.block_until_ready(color_constancy_loss(xa))
    refa = color_constancy_loss_ref(xa)
    assert jnp.allclose(outa, refa, rtol=1e-5, atol=1e-6), (outa, refa)

    # (b) Batch packing: b=4 -> B_TILE=2, still 2 steps on the parallel axis.
    xb = jax.random.uniform(k2, (4, 3, 16, 16), dtype=jnp.float32)
    outb = jax.block_until_ready(color_constancy_loss(xb))
    refb = color_constancy_loss_ref(xb)
    assert jnp.allclose(outb, refb, rtol=1e-5, atol=1e-6), (outb, refb)

    # (c) Dense multi-tile with a ragged, in-kernel-masked last row tile:
    #     hw = 2560 -> 20 rows of 128, tile_rows=8 -> 3 tiles, last has 4 valid rows.
    xc = jax.random.uniform(k3, (2, 3, 40, 64), dtype=jnp.float32)
    outc = jax.block_until_ready(color_constancy_loss(xc, tile_rows=8))
    refc = color_constancy_loss_ref(xc)
    assert jnp.allclose(outc, refc, rtol=1e-5, atol=1e-6), (outc, refc)

    # (d) hw % 128 != 0 fallback (33*47 = 1551): single-tile flat, and multi-tile
    #     flat with the in-kernel lane mask (no jnp.pad anywhere).
    xd = jax.random.uniform(k4, (2, 3, 33, 47), dtype=jnp.float32)
    refd = color_constancy_loss_ref(xd)
    outd1 = jax.block_until_ready(color_constancy_loss(xd))
    outd2 = jax.block_until_ready(color_constancy_loss(xd, flat_tile=512))
    assert jnp.allclose(outd1, refd, rtol=1e-5, atol=1e-6), (outd1, refd)
    assert jnp.allclose(outd2, refd, rtol=1e-5, atol=1e-6), (outd2, refd)

    print("KERNEL_OK")
</pallas_src>

<mosaic_0001>
module attributes {stable_mosaic.version = 11 : i64} {
  func.func @_cc_dense_kernel(%arg0: i32, %arg1: i32, %arg2: memref<1x3x2x128xf32, #tpu.memory_space<vmem>>, %arg3: memref<1x1x128xf32, #tpu.memory_space<vmem>>, %arg4: memref<1x3x128xf32, #tpu.memory_space<vmem>>) attributes {dimension_semantics = [#tpu.dimension_semantics<parallel>, #tpu.dimension_semantics<arbitrary>], iteration_bounds = array<i64: 2, 1>, scalar_prefetch = 0 : i64, scratch_operands = 1 : i64, tpu.core_type = #tpu.core_type<tc>, window_params = [{transform_indices = @transform_0, window_bounds = array<i64: 1, 3, 2, 128>}, {transform_indices = @transform_1, window_bounds = array<i64: 1, 1, 128>}]} {
    %c0_i32 = arith.constant 0 : i32
    %0 = arith.cmpi eq, %arg1, %c0_i32 : i32
    %1 = arith.extui %0 : i1 to i32
    %c0_i32_0 = arith.constant 0 : i32
    %2 = arith.cmpi ne, %1, %c0_i32_0 : i32
    scf.if %2 {
      %cst_12 = arith.constant 0.000000e+00 : f32
      %11 = vector.broadcast %cst_12 : f32 to vector<1x3x128xf32>
      %c0_13 = arith.constant 0 : index
      %c0_14 = arith.constant 0 : index
      %c0_15 = arith.constant 0 : index
      %12 = vector.load %arg4[%c0_13, %c0_14, %c0_15] : memref<1x3x128xf32, #tpu.memory_space<vmem>>, vector<1x3x128xf32>
      tpu.vector_store %arg4[%c0_13, %c0_14, %c0_15], %11 {strides = array<i32>} : memref<1x3x128xf32, #tpu.memory_space<vmem>>, vector<1x3x128xf32>,
    } else {
    }
    %c0 = arith.constant 0 : index
    %c0_1 = arith.constant 0 : index
    %c0_2 = arith.constant 0 : index
    %c0_3 = arith.constant 0 : index
    %3 = vector.load %arg2[%c0, %c0_1, %c0_2, %c0_3] : memref<1x3x2x128xf32, #tpu.memory_space<vmem>>, vector<1x3x2x128xf32>
    %c0_4 = arith.constant 0 : index
    %c0_5 = arith.constant 0 : index
    %c0_6 = arith.constant 0 : index
    %4 = vector.load %arg4[%c0_4, %c0_5, %c0_6] : memref<1x3x128xf32, #tpu.memory_space<vmem>>, vector<1x3x128xf32>
    %cst = arith.constant dense<0.000000e+00> : vector<1x3x128xf32>
    %5 = vector.multi_reduction <add>, %3, %cst [2] : vector<1x3x2x128xf32> to vector<1x3x128xf32>
    %6 = arith.addf %4, %5 : vector<1x3x128xf32>
    %c0_7 = arith.constant 0 : index
    %c0_8 = arith.constant 0 : index
    %c0_9 = arith.constant 0 : index
    %7 = vector.load %arg4[%c0_7, %c0_8, %c0_9] : memref<1x3x128xf32, #tpu.memory_space<vmem>>, vector<1x3x128xf32>
    tpu.vector_store %arg4[%c0_7, %c0_8, %c0_9], %6 {strides = array<i32>} : memref<1x3x128xf32, #tpu.memory_space<vmem>>, vector<1x3x128xf32>,
    %c0_i32_10 = arith.constant 0 : i32
    %8 = arith.cmpi eq, %arg1, %c0_i32_10 : i32
    %9 = arith.extui %8 : i1 to i32
    %c0_i32_11 = arith.constant 0 : i32
    %10 = arith.cmpi ne, %9, %c0_i32_11 : i32
    scf.if %10 {
      %c0_12 = arith.constant 0 : index
      %c0_13 = arith.constant 0 : index
      %c0_14 = arith.constant 0 : index
      %11 = vector.load %arg4[%c0_12, %c0_13, %c0_14] : memref<1x3x128xf32, #tpu.memory_space<vmem>>, vector<1x3x128xf32>
      %cst_15 = arith.constant dense<0.000000e+00> : vector<1x3xf32>
      %12 = vector.multi_reduction <add>, %11, %cst_15 [2] : vector<1x3x128xf32> to vector<1x3xf32>
      %cst_16 = arith.constant 3.906250e-03 : f32
      %13 = vector.broadcast %cst_16 : f32 to vector<1x3xf32>
      %14 = arith.mulf %12, %13 : vector<1x3xf32>
      %15 = vector.extract_strided_slice %14 {offsets = [0, 0], sizes = [1, 1], strides = [1, 1]} : vector<1x3xf32> to vector<1x1xf32>
      %16 = vector.extract_strided_slice %14 {offsets = [0, 1], sizes = [1, 1], strides = [1, 1]} : vector<1x3xf32> to vector<1x1xf32>
      %17 = vector.extract_strided_slice %14 {offsets = [0, 2], sizes = [1, 1], strides = [1, 1]} : vector<1x3xf32> to vector<1x1xf32>
      %18 = arith.subf %15, %16 : vector<1x1xf32>
      %19 = arith.mulf %18, %18 : vector<1x1xf32>
      %20 = arith.subf %15, %17 : vector<1x1xf32>
      %21 = arith.mulf %20, %20 : vector<1x1xf32>
      %22 = arith.subf %17, %16 : vector<1x1xf32>
      %23 = arith.mulf %22, %22 : vector<1x1xf32>
      %24 = arith.mulf %19, %19 : vector<1x1xf32>
      %25 = arith.mulf %21, %21 : vector<1x1xf32>
      %26 = arith.addf %24, %25 : vector<1x1xf32>
      %27 = arith.mulf %23, %23 : vector<1x1xf32>
      %28 = arith.addf %26, %27 : vector<1x1xf32>
      %29 = math.sqrt %28 : vector<1x1xf32>
      %30 = vector.shape_cast %29 : vector<1x1xf32> to vector<1x1x1xf32>
      %31 = vector.shape_cast %30 : vector<1x1x1xf32> to vector<1x1x1xf32>
      %32 = vector.broadcast %31 : vector<1x1x1xf32> to vector<1x1x128xf32>
      %c0_17 = arith.constant 0 : index
      %c0_18 = arith.constant 0 : index
      %c0_19 = arith.constant 0 : index
      %33 = vector.load %arg3[%c0_17, %c0_18, %c0_19] : memref<1x1x128xf32, #tpu.memory_space<vmem>>, vector<1x1x128xf32>
      tpu.vector_store %arg3[%c0_17, %c0_18, %c0_19], %32 {strides = array<i32>} : memref<1x1x128xf32, #tpu.memory_space<vmem>>, vector<1x1x128xf32>,
    } else {
    }
    return
  }
  func.func @transform_0(%arg0: i32, %arg1: i32) -> (i32, i32, i32, i32) {
    %c0_i32 = arith.constant 0 : i32
    %c0_i32_0 = arith.constant 0 : i32
    %c0_i32_1 = arith.constant 0 : i32
    return %arg0, %c0_i32, %arg1, %c0_i32_0 : i32, i32, i32, i32
  }
  func.func @transform_1(%arg0: i32, %arg1: i32) -> (i32, i32, i32) {
    %c0_i32 = arith.constant 0 : i32
    %c0_i32_0 = arith.constant 0 : i32
    %c0_i32_1 = arith.constant 0 : i32
    return %arg0, %c0_i32, %c0_i32_0 : i32, i32, i32
  }
}

</mosaic_0001>

<llo_original>
// kernel: tpu_custom_call.1
$region0: #{tpu_custom_call.1}
  #allocation0 [shape = 'u32[]', space=smem, size = 0x4, offset = 0x4, fixed_abs, tag = 'smem constant byte address 0x4 - core index']
  #allocation1 [shape = 'u32[144,128]{1,0:T(1,128)}', space=vmem, size = 0x12000, scoped, tag = 'internal scratch']
  #allocation2 [shape = 'f32[1,3,128]{2,1,0:T(4,128)}', space=vmem, size = 0x800, scoped, tag = 'scratch operand']
  %s0 = inlined_call_operand.hbm [shape: f32[2,3,2,128], index: 0, kind: input, shape index: {}]
  %s1 = inlined_call_operand.hbm [shape: f32[2,1,128], index: 1, kind: output, shape index: {}]
  %s2 = sld [smem:[#allocation0]]
  $region49: #{tpu_custom_call.1} parent=0
    _
  %s4 = ssub.s32 1, %s2
  %s5 = scalar_select 0, %s4, %s2
  $region1: #{tpu_custom_call.1} parent=0
    #allocation3 [shape = 'u8[6144]{0}', space=vmem, size = 0x1800, scoped, tag = 'input window, operand 0']
    #allocation4 [shape = 's32[2]{0}', space=sflag, size = 0x8, scoped, tag = 'scoped memory for tpu_custom_call.1']
    #allocation5 [shape = 's32[2]{0}', space=sflag, size = 0x8, scoped, tag = 'scoped memory for tpu_custom_call.1']
    #allocation6 [shape = 'u8[1024]{0}', space=vmem, size = 0x400, scoped, tag = 'output window, operand 0']
    %6 = vsyncpa [#allocation4], 0
    %s7 = scalar_lea.sflag [#allocation4], 1
    %8 = vsyncpa %s7, 0
    %9 = vsyncpa [#allocation5], 0
    %s10 = scalar_lea.sflag [#allocation5], 1
    %11 = vsyncpa %s10, 0
    loop: start=0, step=1, limit=4
    $region2: #{tpu_custom_call.1} parent=1 // loop_pre_header
      _
    $region3: #{tpu_custom_call.1} parent=1 // loop_header
      %s13 = sphi 0, %s17
      %p14 = scmp.ge.s32.totalorder %s13, 4
      %s20 = sphi 0, %s32
      %s21 = sphi 0, %s28
      %s22 = sphi 0, %s20
      %s23 = sphi 0, %s21
      %s24 = sphi 0, %s22
      %s25 = sphi 0, %s23
      %s37 = sphi 0, %s39
      %s40 = sphi 0, %s37
      %s41 = sphi 0, %s40
      %s57 = sphi 0, %s41
      %s63 = sphi 0, %s65
      %s66 = sphi 0, %s63
      %s67 = sphi 0, %s66
      %s83 = sphi 0, %s67
    $region4: #{tpu_custom_call.1} parent=1 // loop_header_branch
      %16 = sbr.rel (%p14) target = $region8
    $region5: #{tpu_custom_call.1} parent=1 // loop_body
      %s18 = ssub.s32 %s13, 1
      %s19 = ssub.s32 %s13, 2
      %s26 = sadd.s32 1, %s21
      %p27 = scmp.ge.s32.totalorder %s26, 1
      %s28 = scalar_select %p27, 0, %s26
      %s29 = sadd.s32 1, %s20
      %s30 = scalar_select %p27, %s29, %s20
      %p31 = scmp.ge.s32.totalorder %s30, 2
      %s32 = scalar_select %p31, 0, %s30
      %s33 = ssub.s32 %s20, %s32
      %s34 = ssub.s32 %s21, %s28
      %s35 = sor.u32 %s33, %s34
      %p36 = scmp.eq.s32.totalorder %s35, 0
      %s38 = sadd.s32 %s37, 1
      %s39 = scalar_select %p36, %s37, %s38
      %p42 = pneg %p36
      %p43 = scmp.eq.s32.totalorder %s13, 1
      %p44 = por %p42, %p43
      %p45 = scmp.ne.s32.totalorder %s37, %s40
      %p46 = scmp.eq.s32.totalorder %s13, 0
      %p47 = por %p45, %p46
      %p48 = scmp.ne.s32.totalorder %s37, %s40
      %p49 = scmp.eq.s32.totalorder %s18, 1
      %p50 = por %p48, %p49
      %p51 = scmp.ne.s32.totalorder %s40, %s41
      %p52 = scmp.eq.s32.totalorder %s18, 0
      %p53 = por %p51, %p52
      %p54 = scmp.ne.s32.totalorder %s40, %s41
      %p55 = scmp.eq.s32.totalorder %s19, 1
      %p56 = por %p54, %p55
      %p58 = scmp.ne.s32.totalorder %s41, %s57
      %p59 = scmp.eq.s32.totalorder %s19, 0
      %p60 = por %p58, %p59
      %s61 = ssub.s32 %s20, %s32
      %p62 = scmp.eq.s32.totalorder %s61, 0
      %s64 = sadd.s32 %s63, 1
      %s65 = scalar_select %p62, %s63, %s64
      %p68 = pneg %p62
      %p69 = scmp.eq.s32.totalorder %s13, 1
      %p70 = por %p68, %p69
      %p71 = scmp.ne.s32.totalorder %s63, %s66
      %p72 = scmp.eq.s32.totalorder %s13, 0
      %p73 = por %p71, %p72
      %p74 = scmp.ne.s32.totalorder %s63, %s66
      %p75 = scmp.eq.s32.totalorder %s18, 1
      %p76 = por %p74, %p75
      %p77 = scmp.ne.s32.totalorder %s66, %s67
      %p78 = scmp.eq.s32.totalorder %s18, 0
      %p79 = por %p77, %p78
      %p80 = scmp.ne.s32.totalorder %s66, %s67
      %p81 = scmp.eq.s32.totalorder %s19, 1
      %p82 = por %p80, %p81
      %p84 = scmp.ne.s32.totalorder %s67, %s83
      %p85 = scmp.eq.s32.totalorder %s19, 0
      %p86 = por %p84, %p85
      %p87 = scmp.le.s32.totalorder 1, %s13
      %p88 = scmp.lt.s32.totalorder %s13, 3
      %p89 = pnand %p87, %p88
      %p90 = pneg %p89
      // Predicated region
      $region9: #{tpu_custom_call.1} parent=5 // pred_check
        _
      $region10: #{tpu_custom_call.1} parent=5 // pred_check_branch
        %92 = sbr.rel (%p89) target = $region12
      $region11: #{tpu_custom_call.1} parent=5 // pred_region
        %s93 = ssub.s32 %s13, 1
      $region12: #{tpu_custom_call.1} parent=5 // pred_fallthru
        _
      %p94 = scmp.lt.s32.totalorder %s13, 2
      // Predicated region
      $region13: #{tpu_custom_call.1} parent=5 // pred_check
        %p95 = pneg %p94
      $region14: #{tpu_custom_call.1} parent=5 // pred_check_branch
        %97 = sbr.rel (%p95) target = $region16
      $region15: #{tpu_custom_call.1} parent=5 // pred_region
        // Predicated region
        $region17: #{tpu_custom_call.1} parent=15 // pred_check
          %p98 = pneg %p47
        $region18: #{tpu_custom_call.1} parent=15 // pred_check_branch
          %100 = sbr.rel (%p98) target = $region20
        $region19: #{tpu_custom_call.1} parent=15 // pred_region
          %s101 = sand.u32 %s37, 1
          %s102 = scalar_lea.sflag [#allocation4], %s101
          %s103 = sand.u32 %s37, 1
          %s104 = smul.addr %s103, 6
          %s105 = scalar_lea.vmem [#allocation3], %s104
          %s107 = ssub.s32 96, 96
          %108 = vsyncadd %s102, %s107
          %s109 = smul.addr %s20, 3
          %s110 = sadd.s32 %s21, %s109
          %s111 = smul.addr %s110, 32
          %s112 = scalar_lea.hbm %s0, %s111
          %s113 = sshll.u32 %s105, 4
          %s114 = int_to_ptr.vmem [resolvable:$true] %s113
          %119 = dma.hbm_to_vmem [thread:$0]  %s112, 96, %s114, %s102, 32, 32, 2
        $region20: #{tpu_custom_call.1} parent=15 // pred_fallthru
          _
      $region16: #{tpu_custom_call.1} parent=5 // pred_fallthru
        _
      %p120 = scmp.le.s32.totalorder 1, %s13
      %p121 = scmp.lt.s32.totalorder %s13, 3
      %p122 = pnand %p120, %p121
      %p123 = pneg %p122
      // Predicated region
      $region21: #{tpu_custom_call.1} parent=5 // pred_check
        _
      $region22: #{tpu_custom_call.1} parent=5 // pred_check_branch
        %125 = sbr.rel (%p122) target = $region24
      $region23: #{tpu_custom_call.1} parent=5 // pred_region
        %s126 = ssub.s32 %s13, 1
        %s127 = sand.u32 %s40, 1
        %s128 = scalar_lea.sflag [#allocation4], %s127
        %s129 = sand.u32 %s40, 1
        %s130 = smul.addr %s129, 6
        %s131 = scalar_lea.vmem [#allocation3], %s130
        // Predicated region
        $region25: #{tpu_custom_call.1} parent=23 // pred_check
          %p132 = pneg %p53
        $region26: #{tpu_custom_call.1} parent=23 // pred_check_branch
          %134 = sbr.rel (%p132) target = $region28
        $region27: #{tpu_custom_call.1} parent=23 // pred_region
          %135 = dma.done %s128, 96
        $region28: #{tpu_custom_call.1} parent=23 // pred_fallthru
          _
        %s136 = sand.u32 %s40, 1
        %s137 = scalar_lea.sflag [#allocation4], %s136
        %s138 = sand.u32 %s40, 1
        %s139 = smul.addr %s138, 6
        %s140 = scalar_lea.vmem [#allocation3], %s139
        %p141 = pneg %p53
        %p142 = pneg %p50
        %p143 = pneg %p79
        %p144 = pneg %p76
        %s145 = sand.u32 %s66, 1
        %s146 = scalar_lea.sflag [#allocation5], %s145
        %s147 = sand.u32 %s66, 1
        %s148 = scalar_lea.vmem [#allocation6], %s147
        %p149 = scmp.eq.s32.totalorder %s23, 0
        // Predicated region
        $region29: #{tpu_custom_call.1} parent=23 // pred_check
          %p150 = pneg %p149
        $region30: #{tpu_custom_call.1} parent=23 // pred_check_branch
          %152 = sbr.rel (%p150) target = $region32
        $region31: #{tpu_custom_call.1} parent=23 // pred_region
          %153 = vst [vmem:[#allocation2] sm:$0x7] 0.0
        $region32: #{tpu_custom_call.1} parent=23 // pred_fallthru
          _
        %v154 = vld [vmem:[%s131] sm:$0x3]
        %v155 = vld [vmem:[%s131 + $0x2] sm:$0x3]
        %v156 = vld [vmem:[%s131 + $0x4] sm:$0x3]
        %v157 = vld [vmem:[#allocation2] sm:$0x7]
        %vm158 = vcmask 1041408
        %v159 = vsel %vm158, %v154, 0.0
        %v160 = vrot.slane %v159, 4
        %v161 = vadd.f32 %v159, %v160
        %v162 = vrot.slane %v161, 2
        %v163 = vadd.f32 %v161, %v162
        %v164 = vrot.slane %v163, 1
        %v165 = vadd.f32 %v163, %v164
        %v166 = vsel %vm158, %v155, 0.0
        %v167 = vrot.slane %v166, 4
        %v168 = vadd.f32 %v166, %v167
        %v169 = vrot.slane %v168, 2
        %v170 = vadd.f32 %v168, %v169
        %v171 = vrot.slane %v170, 1
        %v172 = vadd.f32 %v170, %v171
        %v173 = vsel %vm158, %v156, 0.0
        %v174 = vrot.slane %v173, 4
        %v175 = vadd.f32 %v173, %v174
        %v176 = vrot.slane %v175, 2
        %v177 = vadd.f32 %v175, %v176
        %v178 = vrot.slane %v177, 1
        %v179 = vadd.f32 %v177, %v178
        %vm183 = vcmask 1041409
        %v184 = vsel %vm183, %v172, %v165
        %vm185 = vcmask 1042434
        %v186 = vsel %vm185, %v179, %v184
        %v188 = vadd.f32 %v157, %v186
        %189 = vst [vmem:[#allocation2] sm:$0x7] %v188
        // Predicated region
        $region33: #{tpu_custom_call.1} parent=23 // pred_check
          %p190 = pneg %p149
        $region34: #{tpu_custom_call.1} parent=23 // pred_check_branch
          %192 = sbr.rel (%p190) target = $region36
        $region35: #{tpu_custom_call.1} parent=23 // pred_region
          %v193 = vld [vmem:[#allocation2] sm:$0x7]
          %vm194 = vcmask 1042432
          %v195 = vsel %vm194, %v193, 0.0
          %196 = vadd.xlane.f32.xlu0 %v195
          %v197 = vpop.xlane.xlu0 %196
          %v198 = vmul.f32 %v197, 0.00390625
          %v200 = vrot.slane %v198, 1
          %v202 = vsub.f32 %v198, %v200
          %v203 = vmul.f32 %v202, %v202
          %v204 = vrot.slane %v198, 2
          %v206 = vsub.f32 %v198, %v204
          %v207 = vmul.f32 %v206, %v206
          %v208 = vrot.slane %v198, 7
          %v210 = vsub.f32 %v198, %v208
          %v211 = vmul.f32 %v210, %v210
          %v212 = vmul.f32 %v203, %v203
          %v213 = vmul.f32 %v207, %v207
          %v214 = vadd.f32 %v212, %v213
          %v215 = vmul.f32 %v211, %v211
          %v217 = vrot.slane %v215, 2
          %v219 = vadd.f32 %v214, %v217
          %v220 = vrsqrt.pop %v219
          %v221 = vmul.f32 %v219, %v220
          %vm222 = vcmp.eq.f32.partialorder %v219, inf
          %v223 = vsel %vm222, %v219, %v221
          %vm224 = vcmp.eq.f32.partialorder %v219, 0.0
          %v225 = vand.u32 %v219, 2147483648
          %v226 = vsel %vm224, %v225, %v223
          %228 = vset.pattern.permute.xlu0 0
          %229 = vperm.xlu0 %228, %v226
          %v230 = vpop.permute.xlu0 %229
          %232 = vst [vmem:[%s148] sm:$0x1] %v230
        $region36: #{tpu_custom_call.1} parent=23 // pred_fallthru
          _
        %s233 = sand.u32 %s66, 1
        %s234 = scalar_lea.sflag [#allocation5], %s233
        %s235 = sand.u32 %s66, 1
        %s236 = scalar_lea.vmem [#allocation6], %s235
        // Predicated region
        $region37: #{tpu_custom_call.1} parent=23 // pred_check
          %p237 = pneg %p76
        $region38: #{tpu_custom_call.1} parent=23 // pred_check_branch
          %239 = sbr.rel (%p237) target = $region40
        $region39: #{tpu_custom_call.1} parent=23 // pred_region
          %s241 = ssub.s32 16, 16
          %242 = vsyncadd %s234, %s241
          %s243 = smul.addr %s22, 16
          %s244 = scalar_lea.hbm %s1, %s243
          %s246 = sshll.u32 %s236, 4
          %s247 = int_to_ptr.vmem [resolvable:$true] %s246
          %249 = dma.vmem_to_hbm [thread:$0]  %s247, 16, %s244, %s234
        $region40: #{tpu_custom_call.1} parent=23 // pred_fallthru
          _
      $region24: #{tpu_custom_call.1} parent=5 // pred_fallthru
        _
      %p250 = scmp.le.s32.totalorder 2, %s13
      // Predicated region
      $region41: #{tpu_custom_call.1} parent=5 // pred_check
        %p251 = pneg %p250
      $region42: #{tpu_custom_call.1} parent=5 // pred_check_branch
        %253 = sbr.rel (%p251) target = $region44
      $region43: #{tpu_custom_call.1} parent=5 // pred_region
        %s254 = ssub.s32 %s13, 2
        // Predicated region
        $region45: #{tpu_custom_call.1} parent=43 // pred_check
          %p255 = pneg %p82
        $region46: #{tpu_custom_call.1} parent=43 // pred_check_branch
          %257 = sbr.rel (%p255) target = $region48
        $region47: #{tpu_custom_call.1} parent=43 // pred_region
          %s258 = sand.u32 %s67, 1
          %s259 = scalar_lea.sflag [#allocation5], %s258
          %s260 = sand.u32 %s67, 1
          %s261 = scalar_lea.vmem [#allocation6], %s260
          %262 = dma.done %s259, 16
        $region48: #{tpu_custom_call.1} parent=43 // pred_fallthru
          _
      $region44: #{tpu_custom_call.1} parent=5 // pred_fallthru
        _
    $region6: #{tpu_custom_call.1} parent=1 // loop_footer
      %s17 = sadd.s32 1, %s13
    $region7: #{tpu_custom_call.1} parent=1 // loop_footer_branch
      %12 = sbr.rel target = $region3
    $region8: #{tpu_custom_call.1} parent=1 // loop_exit
      _
    %263 = vsyncpa [#allocation4], 1
    %s264 = scalar_lea.sflag [#allocation4], 1
    %265 = vsyncpa %s264, 1
    %266 = vsyncpa [#allocation5], 1
    %s267 = scalar_lea.sflag [#allocation5], 1
    %268 = vsyncpa %s267, 1

</llo_original>
